<compile_context>
chip_gen: v6e
topology: v6e:2x2x1
jax: 0.10.0
libtpu: 0.0.40
codegen_flags: <defaults>
</compile_context>

<pallas_src>
import jax
import jax.numpy as jnp
from jax.experimental import pallas as pl
from jax.experimental.pallas import tpu as pltpu


def dueling_dqn_kernel(x_ref, w1_ref, b1_ref, w2_ref, b2_ref, wh_ref, bh_ref,
                       out_ref):
    wdt = w2_ref.dtype          # f32 or bf16; accumulation is always f32.
    D = x_ref.shape[1]
    x = x_ref[...]              # (tb, D) f32

    if D <= 32:
        # fc1 on the VPU: D unrolled broadcast MACs in f32. Avoids the MXU
        # K-padding tax (K would be padded to 128/256 for K=D~8).
        w1 = w1_ref[...].astype(jnp.float32)          # (D, H), tiny, resident
        acc = x[:, 0:1] * w1[0:1, :]
        for d in range(1, D):
            acc = acc + x[:, d:d + 1] * w1[d:d + 1, :]
        l1 = jnp.maximum(acc + b1_ref[...], 0.0)      # f32 ReLU (v5e-safe)
    else:
        # Large input_dims: MXU path.
        l1 = jnp.maximum(
            jnp.dot(x.astype(wdt), w1_ref[...].astype(wdt),
                    preferred_element_type=jnp.float32) + b1_ref[...], 0.0)

    # fc2 + relu (MXU, f32 accumulation)
    l2 = jnp.dot(l1.astype(wdt), w2_ref[...],
                 preferred_element_type=jnp.float32) + b2_ref[...]
    l2 = jnp.maximum(l2, 0.0)

    # fused value|advantage head: one matmul, one lane-contiguous output slab
    out_ref[...] = jnp.dot(l2.astype(wdt), wh_ref[...],
                           preferred_element_type=jnp.float32) + bh_ref[...]


def _round_up(x, m):
    return ((x + m - 1) // m) * m


def _pick_batch_tile(B, batch_tile, D, H, n_head, vmem_budget=20 << 20):
    """Batch-tile heuristic: big tiles (amortize ~0.35us/step), >=2 steps for
    v7x megacore sharding, clamped to a VMEM working-set budget that is safe
    on every TPU generation (v7x 64 MiB physical / v5e small scoped default)."""
    if B <= 8:
        return B                                   # single tiny tile
    if B <= batch_tile:
        # >=2 grid steps so dimension_semantics=("parallel",) can shard the
        # batch across v7x's two TensorCores (no effect on v5e/v6e).
        tb = _round_up(pl.cdiv(B, 2), 8)
    else:
        tb = max(8, (batch_tile // 8) * 8)
    # Per-row f32 bytes: fc1 acc + l1 + l2 (~3*H) + double-buffered streamed
    # input (2*D) and output (2*n_head) tiles.
    per_row_bytes = 4 * (3 * H + 2 * D + 2 * n_head)
    max_tb = max(8, (vmem_budget // per_row_bytes) // 8 * 8)
    return min(tb, max_tb, _round_up(B, 8))


def dueling_dqn_forward(state, params, *, batch_tile=8192):
    """state: (B, D) float32. Returns (V, A) exactly like the PyTorch module.

    params uses bf16 MXU weights by default (f32 accumulation inside the
    kernel); pass weight_dtype=jnp.float32 to init_params for a debug path.
    """
    B, D = state.shape
    w1, b1 = params["w1"], params["b1"]
    w2, b2 = params["w2"], params["b2"]
    wh, bh = params["wh"], params["bh"]          # fused {V|A} head (from init)
    H = w1.shape[1]
    n_head = wh.shape[1]                         # 1 + n_actions

    tb = _pick_batch_tile(B, batch_tile, D, H, n_head)
    grid = (pl.cdiv(B, tb),)

    resident = lambda i: (0, 0)   # weights/biases: same block every step -> stay in VMEM
    streamed = lambda i: (i, 0)   # state/output: one batch tile per step

    weight_args = (w1, b1, w2, b2, wh, bh)

    flops = 2 * B * (D * H + H * H + H * n_head)
    bytes_accessed = (
        int(state.size) * state.dtype.itemsize
        + sum(int(a.size) * a.dtype.itemsize for a in weight_args)
        + B * n_head * 4
    )

    out = pl.pallas_call(
        dueling_dqn_kernel,
        out_shape=jax.ShapeDtypeStruct((B, n_head), jnp.float32),
        grid=grid,
        in_specs=[pl.BlockSpec((tb, D), streamed)]
                 + [pl.BlockSpec(a.shape, resident) for a in weight_args],
        out_specs=pl.BlockSpec((tb, n_head), streamed),
        compiler_params=pltpu.CompilerParams(
            dimension_semantics=("parallel",),
            vmem_limit_bytes=32 * 1024 * 1024),
        cost_estimate=pl.CostEstimate(
            flops=flops, transcendentals=0, bytes_accessed=bytes_accessed),
    )(state, *weight_args)

    # Split the fused head back into (V, A) to match nn.Module.forward.
    return out[:, :1], out[:, 1:]


def init_params(key, input_dims, n_actions, hidden=128,
                weight_dtype=jnp.bfloat16):
    """PyTorch-style uniform(+-1/sqrt(fan_in)) init.

    * w1 is stored f32 (used on the VPU path inside the kernel; it is tiny).
    * w2 and the fused head weight wh are stored in `weight_dtype`
      (bf16 by default for MXU throughput; f32 for debugging).
    * Biases always f32. V|A head fusion is done ONCE here, not per forward.
    """
    def linear(key, fan_in, fan_out):
        kw, kb = jax.random.split(key)
        bound = 1.0 / jnp.sqrt(float(fan_in))
        w = jax.random.uniform(kw, (fan_in, fan_out), jnp.float32, -bound, bound)
        b = jax.random.uniform(kb, (1, fan_out), jnp.float32, -bound, bound)
        return w, b

    k1, k2, k3, k4 = jax.random.split(key, 4)
    w1, b1 = linear(k1, input_dims, hidden)
    w2, b2 = linear(k2, hidden, hidden)
    wv, bv = linear(k3, hidden, 1)
    wa, ba = linear(k4, hidden, n_actions)
    wh = jnp.concatenate([wv, wa], axis=1).astype(weight_dtype)   # (H, 1+A)
    bh = jnp.concatenate([bv, ba], axis=1)                        # f32
    return {"w1": w1, "b1": b1,
            "w2": w2.astype(weight_dtype), "b2": b2,
            "wh": wh, "bh": bh}


def reference_forward(state, p):
    """Pure-JAX reference mirroring the kernel's dtype handling."""
    wdt = p["w2"].dtype
    l1 = jnp.maximum(
        jnp.dot(state, p["w1"].astype(jnp.float32),
                preferred_element_type=jnp.float32) + p["b1"], 0.0)
    l2 = jnp.maximum(
        jnp.dot(l1.astype(wdt), p["w2"],
                preferred_element_type=jnp.float32) + p["b2"], 0.0)
    q = jnp.dot(l2.astype(wdt), p["wh"],
                preferred_element_type=jnp.float32) + p["bh"]
    return q[:, :1], q[:, 1:]


if __name__ == "__main__":
    D, H, N_ACTIONS = 8, 128, 4
    key = jax.random.PRNGKey(0)
    k_params, k_s1, k_s2, k_s3 = jax.random.split(key, 4)

    # --- Test 1: tiny batch, f32 debug weights, single grid step, tight tol.
    params_f32 = init_params(k_params, input_dims=D, n_actions=N_ACTIONS,
                             hidden=H, weight_dtype=jnp.float32)
    B1 = 2
    state1 = jax.random.normal(k_s1, (B1, D), jnp.float32)
    V, A = dueling_dqn_forward(state1, params_f32)
    jax.block_until_ready((V, A))
    V_ref, A_ref = reference_forward(state1, params_f32)
    assert V.shape == (B1, 1) and A.shape == (B1, N_ACTIONS)
    assert jnp.allclose(V, V_ref, atol=1e-4, rtol=1e-4)
    assert jnp.allclose(A, A_ref, atol=1e-4, rtol=1e-4)

    # --- Test 2: multi-tile batch grid, default bf16 weights, looser tol.
    params = init_params(k_params, input_dims=D, n_actions=N_ACTIONS, hidden=H)
    B2 = 48
    state2 = jax.random.normal(k_s2, (B2, D), jnp.float32)
    V2, A2 = dueling_dqn_forward(state2, params, batch_tile=16)   # grid=(3,)
    jax.block_until_ready((V2, A2))
    V2_ref, A2_ref = reference_forward(state2, params)
    assert jnp.allclose(V2, V2_ref, atol=2e-2, rtol=2e-2)
    assert jnp.allclose(A2, A2_ref, atol=2e-2, rtol=2e-2)

    # --- Test 3: non-divisible B (partial last tile), bf16 weights.
    B3 = 50
    state3 = jax.random.normal(k_s3, (B3, D), jnp.float32)
    V3, A3 = dueling_dqn_forward(state3, params, batch_tile=16)   # grid=(4,), last tile partial
    jax.block_until_ready((V3, A3))
    V3_ref, A3_ref = reference_forward(state3, params)
    assert V3.shape == (B3, 1) and A3.shape == (B3, N_ACTIONS)
    assert jnp.allclose(V3, V3_ref, atol=2e-2, rtol=2e-2)
    assert jnp.allclose(A3, A3_ref, atol=2e-2, rtol=2e-2)

    # --- Test 4: default batch_tile path (>=2 grid steps for v7x), f32 weights.
    V4, A4 = dueling_dqn_forward(state3, params_f32)              # tb=32, grid=(2,)
    jax.block_until_ready((V4, A4))
    V4_ref, A4_ref = reference_forward(state3, params_f32)
    assert jnp.allclose(V4, V4_ref, atol=1e-4, rtol=1e-4)
    assert jnp.allclose(A4, A4_ref, atol=1e-4, rtol=1e-4)

    print("KERNEL_OK")
</pallas_src>

<mosaic_0001>
module attributes {stable_mosaic.version = 11 : i64} {
  func.func @dueling_dqn_kernel(%arg0: i32, %arg1: memref<2x8xf32, #tpu.memory_space<vmem>>, %arg2: memref<8x128xf32, #tpu.memory_space<vmem>>, %arg3: memref<1x128xf32, #tpu.memory_space<vmem>>, %arg4: memref<128x128xf32, #tpu.memory_space<vmem>>, %arg5: memref<1x128xf32, #tpu.memory_space<vmem>>, %arg6: memref<128x5xf32, #tpu.memory_space<vmem>>, %arg7: memref<1x5xf32, #tpu.memory_space<vmem>>, %arg8: memref<2x5xf32, #tpu.memory_space<vmem>>) attributes {dimension_semantics = [#tpu.dimension_semantics<parallel>], iteration_bounds = array<i64: 1>, scalar_prefetch = 0 : i64, scratch_operands = 0 : i64, tpu.core_type = #tpu.core_type<tc>, window_params = [{transform_indices = @transform_0, window_bounds = array<i64: 2, 8>}, {pipeline_mode = #tpu.pipeline_mode<synchronous>, transform_indices = @transform_1, window_bounds = array<i64: 8, 128>}, {pipeline_mode = #tpu.pipeline_mode<synchronous>, transform_indices = @transform_2, window_bounds = array<i64: 1, 128>}, {pipeline_mode = #tpu.pipeline_mode<synchronous>, transform_indices = @transform_3, window_bounds = array<i64: 128, 128>}, {pipeline_mode = #tpu.pipeline_mode<synchronous>, transform_indices = @transform_4, window_bounds = array<i64: 1, 128>}, {pipeline_mode = #tpu.pipeline_mode<synchronous>, transform_indices = @transform_5, window_bounds = array<i64: 128, 5>}, {pipeline_mode = #tpu.pipeline_mode<synchronous>, transform_indices = @transform_6, window_bounds = array<i64: 1, 5>}, {transform_indices = @transform_7, window_bounds = array<i64: 2, 5>}]} {
    %c0 = arith.constant 0 : index
    %c0_0 = arith.constant 0 : index
    %0 = vector.load %arg1[%c0, %c0_0] : memref<2x8xf32, #tpu.memory_space<vmem>>, vector<2x8xf32>
    %c0_1 = arith.constant 0 : index
    %c0_2 = arith.constant 0 : index
    %1 = vector.load %arg2[%c0_1, %c0_2] : memref<8x128xf32, #tpu.memory_space<vmem>>, vector<8x128xf32>
    %2 = vector.extract_strided_slice %0 {offsets = [0, 0], sizes = [2, 1], strides = [1, 1]} : vector<2x8xf32> to vector<2x1xf32>
    %3 = vector.extract_strided_slice %1 {offsets = [0, 0], sizes = [1, 128], strides = [1, 1]} : vector<8x128xf32> to vector<1x128xf32>
    %4 = vector.broadcast %2 : vector<2x1xf32> to vector<2x128xf32>
    %5 = vector.broadcast %3 : vector<1x128xf32> to vector<2x128xf32>
    %6 = arith.mulf %4, %5 : vector<2x128xf32>
    %7 = vector.extract_strided_slice %0 {offsets = [0, 1], sizes = [2, 1], strides = [1, 1]} : vector<2x8xf32> to vector<2x1xf32>
    %8 = vector.extract_strided_slice %1 {offsets = [1, 0], sizes = [1, 128], strides = [1, 1]} : vector<8x128xf32> to vector<1x128xf32>
    %9 = vector.broadcast %7 : vector<2x1xf32> to vector<2x128xf32>
    %10 = vector.broadcast %8 : vector<1x128xf32> to vector<2x128xf32>
    %11 = arith.mulf %9, %10 : vector<2x128xf32>
    %12 = arith.addf %6, %11 : vector<2x128xf32>
    %13 = vector.extract_strided_slice %0 {offsets = [0, 2], sizes = [2, 1], strides = [1, 1]} : vector<2x8xf32> to vector<2x1xf32>
    %14 = vector.extract_strided_slice %1 {offsets = [2, 0], sizes = [1, 128], strides = [1, 1]} : vector<8x128xf32> to vector<1x128xf32>
    %15 = vector.broadcast %13 : vector<2x1xf32> to vector<2x128xf32>
    %16 = vector.broadcast %14 : vector<1x128xf32> to vector<2x128xf32>
    %17 = arith.mulf %15, %16 : vector<2x128xf32>
    %18 = arith.addf %12, %17 : vector<2x128xf32>
    %19 = vector.extract_strided_slice %0 {offsets = [0, 3], sizes = [2, 1], strides = [1, 1]} : vector<2x8xf32> to vector<2x1xf32>
    %20 = vector.extract_strided_slice %1 {offsets = [3, 0], sizes = [1, 128], strides = [1, 1]} : vector<8x128xf32> to vector<1x128xf32>
    %21 = vector.broadcast %19 : vector<2x1xf32> to vector<2x128xf32>
    %22 = vector.broadcast %20 : vector<1x128xf32> to vector<2x128xf32>
    %23 = arith.mulf %21, %22 : vector<2x128xf32>
    %24 = arith.addf %18, %23 : vector<2x128xf32>
    %25 = vector.extract_strided_slice %0 {offsets = [0, 4], sizes = [2, 1], strides = [1, 1]} : vector<2x8xf32> to vector<2x1xf32>
    %26 = vector.extract_strided_slice %1 {offsets = [4, 0], sizes = [1, 128], strides = [1, 1]} : vector<8x128xf32> to vector<1x128xf32>
    %27 = vector.broadcast %25 : vector<2x1xf32> to vector<2x128xf32>
    %28 = vector.broadcast %26 : vector<1x128xf32> to vector<2x128xf32>
    %29 = arith.mulf %27, %28 : vector<2x128xf32>
    %30 = arith.addf %24, %29 : vector<2x128xf32>
    %31 = vector.extract_strided_slice %0 {offsets = [0, 5], sizes = [2, 1], strides = [1, 1]} : vector<2x8xf32> to vector<2x1xf32>
    %32 = vector.extract_strided_slice %1 {offsets = [5, 0], sizes = [1, 128], strides = [1, 1]} : vector<8x128xf32> to vector<1x128xf32>
    %33 = vector.broadcast %31 : vector<2x1xf32> to vector<2x128xf32>
    %34 = vector.broadcast %32 : vector<1x128xf32> to vector<2x128xf32>
    %35 = arith.mulf %33, %34 : vector<2x128xf32>
    %36 = arith.addf %30, %35 : vector<2x128xf32>
    %37 = vector.extract_strided_slice %0 {offsets = [0, 6], sizes = [2, 1], strides = [1, 1]} : vector<2x8xf32> to vector<2x1xf32>
    %38 = vector.extract_strided_slice %1 {offsets = [6, 0], sizes = [1, 128], strides = [1, 1]} : vector<8x128xf32> to vector<1x128xf32>
    %39 = vector.broadcast %37 : vector<2x1xf32> to vector<2x128xf32>
    %40 = vector.broadcast %38 : vector<1x128xf32> to vector<2x128xf32>
    %41 = arith.mulf %39, %40 : vector<2x128xf32>
    %42 = arith.addf %36, %41 : vector<2x128xf32>
    %43 = vector.extract_strided_slice %0 {offsets = [0, 7], sizes = [2, 1], strides = [1, 1]} : vector<2x8xf32> to vector<2x1xf32>
    %44 = vector.extract_strided_slice %1 {offsets = [7, 0], sizes = [1, 128], strides = [1, 1]} : vector<8x128xf32> to vector<1x128xf32>
    %45 = vector.broadcast %43 : vector<2x1xf32> to vector<2x128xf32>
    %46 = vector.broadcast %44 : vector<1x128xf32> to vector<2x128xf32>
    %47 = arith.mulf %45, %46 : vector<2x128xf32>
    %48 = arith.addf %42, %47 : vector<2x128xf32>
    %c0_3 = arith.constant 0 : index
    %c0_4 = arith.constant 0 : index
    %49 = vector.load %arg3[%c0_3, %c0_4] : memref<1x128xf32, #tpu.memory_space<vmem>>, vector<1x128xf32>
    %50 = vector.broadcast %49 : vector<1x128xf32> to vector<2x128xf32>
    %51 = arith.addf %48, %50 : vector<2x128xf32>
    %cst = arith.constant 0.000000e+00 : f32
    %52 = vector.broadcast %cst : f32 to vector<2x128xf32>
    %53 = arith.maximumf %51, %52 : vector<2x128xf32>
    %c0_5 = arith.constant 0 : index
    %c0_6 = arith.constant 0 : index
    %54 = vector.load %arg4[%c0_5, %c0_6] : memref<128x128xf32, #tpu.memory_space<vmem>>, vector<128x128xf32>
    %cst_7 = arith.constant dense<0.000000e+00> : vector<2x128xf32>
    %55 = tpu.matmul %53, %54, %cst_7 {dimension_numbers = #tpu.dot_dimension_numbers<[1], [0], [0], [1], [0, 0, 1, 1], [], []>} : vector<2x128xf32>, vector<128x128xf32>, vector<2x128xf32> -> vector<2x128xf32>
    %c0_8 = arith.constant 0 : index
    %c0_9 = arith.constant 0 : index
    %56 = vector.load %arg5[%c0_8, %c0_9] : memref<1x128xf32, #tpu.memory_space<vmem>>, vector<1x128xf32>
    %57 = vector.broadcast %56 : vector<1x128xf32> to vector<2x128xf32>
    %58 = arith.addf %55, %57 : vector<2x128xf32>
    %cst_10 = arith.constant 0.000000e+00 : f32
    %59 = vector.broadcast %cst_10 : f32 to vector<2x128xf32>
    %60 = arith.maximumf %58, %59 : vector<2x128xf32>
    %c0_11 = arith.constant 0 : index
    %c0_12 = arith.constant 0 : index
    %61 = vector.load %arg6[%c0_11, %c0_12] : memref<128x5xf32, #tpu.memory_space<vmem>>, vector<128x5xf32>
    %cst_13 = arith.constant dense<0.000000e+00> : vector<2x5xf32>
    %62 = tpu.matmul %60, %61, %cst_13 {dimension_numbers = #tpu.dot_dimension_numbers<[1], [0], [0], [1], [0, 0, 1, 1], [], []>} : vector<2x128xf32>, vector<128x5xf32>, vector<2x5xf32> -> vector<2x5xf32>
    %c0_14 = arith.constant 0 : index
    %c0_15 = arith.constant 0 : index
    %63 = vector.load %arg7[%c0_14, %c0_15] : memref<1x5xf32, #tpu.memory_space<vmem>>, vector<1x5xf32>
    %64 = vector.broadcast %63 : vector<1x5xf32> to vector<2x5xf32>
    %65 = arith.addf %62, %64 : vector<2x5xf32>
    %c0_16 = arith.constant 0 : index
    %c0_17 = arith.constant 0 : index
    %66 = vector.load %arg8[%c0_16, %c0_17] : memref<2x5xf32, #tpu.memory_space<vmem>>, vector<2x5xf32>
    tpu.vector_store %arg8[%c0_16, %c0_17], %65 {strides = array<i32>} : memref<2x5xf32, #tpu.memory_space<vmem>>, vector<2x5xf32>,
    return
  }
  func.func @transform_0(%arg0: i32) -> (i32, i32) {
    %c0_i32 = arith.constant 0 : i32
    %c0_i32_0 = arith.constant 0 : i32
    return %arg0, %c0_i32 : i32, i32
  }
  func.func @transform_1(%arg0: i32) -> (i32, i32) {
    %c0_i32 = arith.constant 0 : i32
    %c0_i32_0 = arith.constant 0 : i32
    %c0_i32_1 = arith.constant 0 : i32
    return %c0_i32, %c0_i32_0 : i32, i32
  }
  func.func @transform_2(%arg0: i32) -> (i32, i32) {
    %c0_i32 = arith.constant 0 : i32
    %c0_i32_0 = arith.constant 0 : i32
    %c0_i32_1 = arith.constant 0 : i32
    return %c0_i32, %c0_i32_0 : i32, i32
  }
  func.func @transform_3(%arg0: i32) -> (i32, i32) {
    %c0_i32 = arith.constant 0 : i32
    %c0_i32_0 = arith.constant 0 : i32
    %c0_i32_1 = arith.constant 0 : i32
    return %c0_i32, %c0_i32_0 : i32, i32
  }
  func.func @transform_4(%arg0: i32) -> (i32, i32) {
    %c0_i32 = arith.constant 0 : i32
    %c0_i32_0 = arith.constant 0 : i32
    %c0_i32_1 = arith.constant 0 : i32
    return %c0_i32, %c0_i32_0 : i32, i32
  }
  func.func @transform_5(%arg0: i32) -> (i32, i32) {
    %c0_i32 = arith.constant 0 : i32
    %c0_i32_0 = arith.constant 0 : i32
    %c0_i32_1 = arith.constant 0 : i32
    return %c0_i32, %c0_i32_0 : i32, i32
  }
  func.func @transform_6(%arg0: i32) -> (i32, i32) {
    %c0_i32 = arith.constant 0 : i32
    %c0_i32_0 = arith.constant 0 : i32
    %c0_i32_1 = arith.constant 0 : i32
    return %c0_i32, %c0_i32_0 : i32, i32
  }
  func.func @transform_7(%arg0: i32) -> (i32, i32) {
    %c0_i32 = arith.constant 0 : i32
    %c0_i32_0 = arith.constant 0 : i32
    return %arg0, %c0_i32 : i32, i32
  }
}

</mosaic_0001>

<llo_original>
// kernel: tpu_custom_call.1
$region0: #{tpu_custom_call.1}
  #allocation0 [shape = 'u32[]', space=smem, size = 0x4, offset = 0x4, fixed_abs, tag = 'smem constant byte address 0x4 - core index']
  #allocation1 [shape = 'u32[144,128]{1,0:T(1,128)}', space=vmem, size = 0x12000, scoped, tag = 'internal scratch']
  %s0 = inlined_call_operand.hbm [shape: f32[2,8], index: 0, kind: input, shape index: {}]
  %s1 = inlined_call_operand.vmem [shape: f32[8,128], index: 1, kind: input, shape index: {}]
  %s2 = inlined_call_operand.vmem [shape: f32[1,128], index: 2, kind: input, shape index: {}]
  %s3 = inlined_call_operand.vmem [shape: f32[128,128], index: 3, kind: input, shape index: {}]
  %s4 = inlined_call_operand.hbm [shape: f32[1,128], index: 4, kind: input, shape index: {}]
  %s5 = inlined_call_operand.vmem [shape: f32[128,5], index: 5, kind: input, shape index: {}]
  %s6 = inlined_call_operand.vmem [shape: f32[1,5], index: 6, kind: input, shape index: {}]
  %s7 = inlined_call_operand.hbm [shape: f32[2,5], index: 7, kind: output, shape index: {}]
  %s8 = sld [smem:[#allocation0]]
  $region46: #{tpu_custom_call.1} parent=0
    _
  %s10 = ssub.s32 1, %s8
  %s11 = scalar_select 0, %s10, %s8
  $region1: #{tpu_custom_call.1} parent=0
    #allocation2 [shape = 'u8[1024]{0}', space=vmem, size = 0x400, scoped, tag = 'input window, operand 0, single buffered']
    #allocation3 [shape = 's32[1]{0}', space=sflag, size = 0x4, scoped, tag = 'scoped memory for tpu_custom_call.1']
    #allocation4 [shape = 's32[1]{0}', space=sflag, size = 0x4, scoped, tag = 'scoped memory for tpu_custom_call.1']
    #allocation5 [shape = 'u8[512]{0}', space=vmem, size = 0x400, scoped, tag = 'input window, operand 4, single buffered']
    #allocation6 [shape = 's32[1]{0}', space=sflag, size = 0x4, scoped, tag = 'scoped memory for tpu_custom_call.1']
    #allocation7 [shape = 'u8[1024]{0}', space=vmem, size = 0x400, scoped, tag = 'output window, operand 0, single buffered']
    %12 = vsyncpa [#allocation3], 0
    %13 = vsyncpa [#allocation6], 0
    %14 = vsyncpa [#allocation4], 0
    // Predicated region
    $region2: #{tpu_custom_call.1} parent=1 // pred_check
      _
    $region3: #{tpu_custom_call.1} parent=1 // pred_check_branch
      %16 = sbr.rel (0) target = $region5
    $region4: #{tpu_custom_call.1} parent=1 // pred_region
      %s18 = ssub.s32 32, 32
      %19 = vsyncadd [#allocation3], %s18
      %s21 = sshll.u32 [#allocation2], 4
      %s22 = int_to_ptr.vmem [resolvable:$true] %s21
      %24 = dma.hbm_to_vmem [thread:$0]  %s0, 32, %s22, [#allocation3]
    $region5: #{tpu_custom_call.1} parent=1 // pred_fallthru
      _
    // Predicated region
    $region6: #{tpu_custom_call.1} parent=1 // pred_check
      _
    $region7: #{tpu_custom_call.1} parent=1 // pred_check_branch
      %26 = sbr.rel (0) target = $region9
    $region8: #{tpu_custom_call.1} parent=1 // pred_region
      _
    $region9: #{tpu_custom_call.1} parent=1 // pred_fallthru
      _
    // Predicated region
    $region10: #{tpu_custom_call.1} parent=1 // pred_check
      _
    $region11: #{tpu_custom_call.1} parent=1 // pred_check_branch
      %28 = sbr.rel (0) target = $region13
    $region12: #{tpu_custom_call.1} parent=1 // pred_region
      _
    $region13: #{tpu_custom_call.1} parent=1 // pred_fallthru
      _
    // Predicated region
    $region14: #{tpu_custom_call.1} parent=1 // pred_check
      _
    $region15: #{tpu_custom_call.1} parent=1 // pred_check_branch
      %30 = sbr.rel (0) target = $region17
    $region16: #{tpu_custom_call.1} parent=1 // pred_region
      _
    $region17: #{tpu_custom_call.1} parent=1 // pred_fallthru
      _
    // Predicated region
    $region18: #{tpu_custom_call.1} parent=1 // pred_check
      _
    $region19: #{tpu_custom_call.1} parent=1 // pred_check_branch
      %32 = sbr.rel (0) target = $region21
    $region20: #{tpu_custom_call.1} parent=1 // pred_region
      %s34 = ssub.s32 16, 16
      %35 = vsyncadd [#allocation6], %s34
      %s37 = sshll.u32 [#allocation5], 4
      %s38 = int_to_ptr.vmem [resolvable:$true] %s37
      %40 = dma.hbm_to_vmem [thread:$0]  %s4, 16, %s38, [#allocation6]
    $region21: #{tpu_custom_call.1} parent=1 // pred_fallthru
      _
    // Predicated region
    $region22: #{tpu_custom_call.1} parent=1 // pred_check
      _
    $region23: #{tpu_custom_call.1} parent=1 // pred_check_branch
      %42 = sbr.rel (0) target = $region25
    $region24: #{tpu_custom_call.1} parent=1 // pred_region
      _
    $region25: #{tpu_custom_call.1} parent=1 // pred_fallthru
      _
    // Predicated region
    $region26: #{tpu_custom_call.1} parent=1 // pred_check
      _
    $region27: #{tpu_custom_call.1} parent=1 // pred_check_branch
      %44 = sbr.rel (0) target = $region29
    $region28: #{tpu_custom_call.1} parent=1 // pred_region
      _
    $region29: #{tpu_custom_call.1} parent=1 // pred_fallthru
      _
    // Predicated region
    $region30: #{tpu_custom_call.1} parent=1 // pred_check
      _
    $region31: #{tpu_custom_call.1} parent=1 // pred_check_branch
      %46 = sbr.rel (0) target = $region33
    $region32: #{tpu_custom_call.1} parent=1 // pred_region
      %47 = dma.done [#allocation3], 32
    $region33: #{tpu_custom_call.1} parent=1 // pred_fallthru
      _
    // Predicated region
    $region34: #{tpu_custom_call.1} parent=1 // pred_check
      _
    $region35: #{tpu_custom_call.1} parent=1 // pred_check_branch
      %49 = sbr.rel (0) target = $region37
    $region36: #{tpu_custom_call.1} parent=1 // pred_region
      %50 = dma.done [#allocation6], 16
    $region37: #{tpu_custom_call.1} parent=1 // pred_fallthru
      _
    %v51 = vld [vmem:[#allocation2] sm:$0x3]
    %v52 = vld [vmem:[%s1] sm:$0xff]
    %54 = vset.pattern.permute.xlu0 0
    %55 = vperm.xlu0 %54, %v51
    %v56 = vpop.permute.xlu0 %55
    %v58 = vlaneseq
    %v59 = vshrl.u32 %v58, 7
    %v60 = vsub.s32 0, %v59
    %v61 = vrot.slane %v52, %v60
    %v62 = vmul.f32 %v56, %v61
    %63 = vset.pattern.permute.xlu0 1
    %64 = vperm.xlu0 %63, %v51
    %v65 = vpop.permute.xlu0 %64
    %v67 = vlaneseq
    %v68 = vshrl.u32 %v67, 7
    %v69 = vsub.s32 1, %v68
    %v70 = vrot.slane %v52, %v69
    %v71 = vmul.f32 %v65, %v70
    %v72 = vadd.f32 %v62, %v71
    %73 = vset.pattern.permute.xlu0 2
    %74 = vperm.xlu0 %73, %v51
    %v75 = vpop.permute.xlu0 %74
    %v77 = vlaneseq
    %v78 = vshrl.u32 %v77, 7
    %v79 = vsub.s32 2, %v78
    %v80 = vrot.slane %v52, %v79
    %v81 = vmul.f32 %v75, %v80
    %v82 = vadd.f32 %v72, %v81
    %83 = vset.pattern.permute.xlu0 3
    %84 = vperm.xlu0 %83, %v51
    %v85 = vpop.permute.xlu0 %84
    %v87 = vlaneseq
    %v88 = vshrl.u32 %v87, 7
    %v89 = vsub.s32 3, %v88
    %v90 = vrot.slane %v52, %v89
    %v91 = vmul.f32 %v85, %v90
    %v92 = vadd.f32 %v82, %v91
    %93 = vset.pattern.permute.xlu0 4
    %94 = vperm.xlu0 %93, %v51
    %v95 = vpop.permute.xlu0 %94
    %v97 = vlaneseq
    %v98 = vshrl.u32 %v97, 7
    %v99 = vsub.s32 4, %v98
    %v100 = vrot.slane %v52, %v99
    %v101 = vmul.f32 %v95, %v100
    %v102 = vadd.f32 %v92, %v101
    %103 = vset.pattern.permute.xlu0 5
    %104 = vperm.xlu0 %103, %v51
    %v105 = vpop.permute.xlu0 %104
    %v107 = vlaneseq
    %v108 = vshrl.u32 %v107, 7
    %v109 = vsub.s32 5, %v108
    %v110 = vrot.slane %v52, %v109
    %v111 = vmul.f32 %v105, %v110
    %v112 = vadd.f32 %v102, %v111
    %113 = vset.pattern.permute.xlu0 6
    %114 = vperm.xlu0 %113, %v51
    %v115 = vpop.permute.xlu0 %114
    %v117 = vlaneseq
    %v118 = vshrl.u32 %v117, 7
    %v119 = vsub.s32 6, %v118
    %v120 = vrot.slane %v52, %v119
    %v121 = vmul.f32 %v115, %v120
    %v122 = vadd.f32 %v112, %v121
    %123 = vset.pattern.permute.xlu0 7
    %124 = vperm.xlu0 %123, %v51
    %v125 = vpop.permute.xlu0 %124
    %v127 = vlaneseq
    %v128 = vshrl.u32 %v127, 7
    %v129 = vsub.s32 7, %v128
    %v130 = vrot.slane %v52, %v129
    %v131 = vmul.f32 %v125, %v130
    %v132 = vadd.f32 %v122, %v131
    %v133 = vld [vmem:[%s2] sm:$0x1]
    %v135 = vlaneseq
    %v136 = vshrl.u32 %v135, 7
    %v137 = vsub.s32 0, %v136
    %v138 = vrot.slane %v133, %v137
    %v140 = vadd.f32 %v132, %v138
    %v141 = vmax.f32 %v140, 0.0
    %v142 = vld [vmem:[%s3] sm:$0xff]
    %v143 = vld [vmem:[%s3 + $0x8] sm:$0xff]
    %v144 = vld [vmem:[%s3 + $0x10] sm:$0xff]
    %v145 = vld [vmem:[%s3 + $0x18] sm:$0xff]
    %v146 = vld [vmem:[%s3 + $0x20] sm:$0xff]
    %v147 = vld [vmem:[%s3 + $0x28] sm:$0xff]
    %v148 = vld [vmem:[%s3 + $0x30] sm:$0xff]
    %v149 = vld [vmem:[%s3 + $0x38] sm:$0xff]
    %v150 = vld [vmem:[%s3 + $0x40] sm:$0xff]
    %v151 = vld [vmem:[%s3 + $0x48] sm:$0xff]
    %v152 = vld [vmem:[%s3 + $0x50] sm:$0xff]
    %v153 = vld [vmem:[%s3 + $0x58] sm:$0xff]
    %v154 = vld [vmem:[%s3 + $0x60] sm:$0xff]
    %v155 = vld [vmem:[%s3 + $0x68] sm:$0xff]
    %v156 = vld [vmem:[%s3 + $0x70] sm:$0xff]
    %v157 = vld [vmem:[%s3 + $0x78] sm:$0xff]
    %v158 = vld [vmem:[#allocation5] sm:$0x1]
    %v160 = vlaneseq
    %v161 = vshrl.u32 %v160, 7
    %v162 = vsub.s32 0, %v161
    %v163 = vrot.slane %v158, %v162
    %165 = vmatprep.subr.mxu0 0.0
    %166 = vmatpush1.msra.mxu0 %v157
    %167 = vmatprep.subr.mxu0 0.0
    %168 = vmatpush1.msra.mxu0 %v156
    %169 = vmatprep.subr.mxu0 0.0
    %170 = vmatpush1.msra.mxu0 %v155
    %171 = vmatprep.subr.mxu0 0.0
    %172 = vmatpush1.msra.mxu0 %v154
    %173 = vmatprep.subr.mxu0 0.0
    %174 = vmatpush1.msra.mxu0 %v153
    %175 = vmatprep.subr.mxu0 0.0
    %176 = vmatpush1.msra.mxu0 %v152
    %177 = vmatprep.subr.mxu0 0.0
    %178 = vmatpush1.msra.mxu0 %v151
    %179 = vmatprep.subr.mxu0 0.0
    %180 = vmatpush1.msra.mxu0 %v150
    %181 = vmatprep.subr.mxu0 0.0
    %182 = vmatpush1.msra.mxu0 %v149
    %183 = vmatprep.subr.mxu0 0.0
    %184 = vmatpush1.msra.mxu0 %v148
    %185 = vmatprep.subr.mxu0 0.0
    %186 = vmatpush1.msra.mxu0 %v147
    %187 = vmatprep.subr.mxu0 0.0
    %188 = vmatpush1.msra.mxu0 %v146
    %189 = vmatprep.subr.mxu0 0.0
    %190 = vmatpush1.msra.mxu0 %v145
    %191 = vmatprep.subr.mxu0 0.0
    %192 = vmatpush1.msra.mxu0 %v144
    %193 = vmatprep.subr.mxu0 0.0
    %194 = vmatpush1.msra.mxu0 %v143
    %195 = vmatprep.subr.mxu0 0.0
    %196 = vmatpush1.msra.mxu0 %v142
    %197 = vmatprep.subr.mxu0 0.0
    %198 = vmatpush2.msra.mxu0 0.0
    %199 = vmatprep.subr.mxu0 0.0
    %200 = vmatpush2.msra.mxu0 0.0
    %201 = vmatprep.subr.mxu0 0.0
    %202 = vmatpush2.msra.mxu0 0.0
    %203 = vmatprep.subr.mxu0 0.0
    %204 = vmatpush2.msra.mxu0 0.0
    %205 = vmatprep.subr.mxu0 0.0
    %206 = vmatpush2.msra.mxu0 0.0
    %207 = vmatprep.subr.mxu0 0.0
    %208 = vmatpush2.msra.mxu0 0.0
    %209 = vmatprep.subr.mxu0 0.0
    %210 = vmatpush2.msra.mxu0 0.0
    %211 = vmatprep.subr.mxu0 0.0
    %212 = vmatpush2.msra.mxu0 0.0
    %213 = vmatprep.subr.mxu0 0.0
    %214 = vmatpush2.msra.mxu0 0.0
    %215 = vmatprep.subr.mxu0 0.0
    %216 = vmatpush2.msra.mxu0 0.0
    %217 = vmatprep.subr.mxu0 0.0
    %218 = vmatpush2.msra.mxu0 0.0
    %219 = vmatprep.subr.mxu0 0.0
    %220 = vmatpush2.msra.mxu0 0.0
    %221 = vmatprep.subr.mxu0 0.0
    %222 = vmatpush2.msra.mxu0 0.0
    %223 = vmatprep.subr.mxu0 0.0
    %224 = vmatpush2.msra.mxu0 0.0
    %225 = vmatprep.subr.mxu0 0.0
    %226 = vmatpush2.msra.mxu0 0.0
    %227 = vmatprep.subr.mxu0 0.0
    %228 = vmatpush2.msra.mxu0 0.0
    %229 = vmatprep.mubr.f32.mxu0 0.0
    %230 = vmatmul.mubr.f32.gmra.mxu0 %v141
    %v231 = vpop.f32.mrf.mxu0
    %v232 = vadd.f32 %v163, %v231
    %v233 = vpop.f32.mrf.mxu0
    %234 = vdwg.mxu0
    %v235 = vmax.f32 %v232, 0.0
    %v236 = vld [vmem:[%s5] sm:$0xff]
    %v237 = vld [vmem:[%s5 + $0x8] sm:$0xff]
    %v238 = vld [vmem:[%s5 + $0x10] sm:$0xff]
    %v239 = vld [vmem:[%s5 + $0x18] sm:$0xff]
    %v240 = vld [vmem:[%s5 + $0x20] sm:$0xff]
    %v241 = vld [vmem:[%s5 + $0x28] sm:$0xff]
    %v242 = vld [vmem:[%s5 + $0x30] sm:$0xff]
    %v243 = vld [vmem:[%s5 + $0x38] sm:$0xff]
    %v244 = vld [vmem:[%s5 + $0x40] sm:$0xff]
    %v245 = vld [vmem:[%s5 + $0x48] sm:$0xff]
    %v246 = vld [vmem:[%s5 + $0x50] sm:$0xff]
    %v247 = vld [vmem:[%s5 + $0x58] sm:$0xff]
    %v248 = vld [vmem:[%s5 + $0x60] sm:$0xff]
    %v249 = vld [vmem:[%s5 + $0x68] sm:$0xff]
    %v250 = vld [vmem:[%s5 + $0x70] sm:$0xff]
    %v251 = vld [vmem:[%s5 + $0x78] sm:$0xff]
    %v252 = vld [vmem:[%s6] sm:$0x1]
    %v254 = vlaneseq
    %v255 = vshrl.u32 %v254, 7
    %v256 = vsub.s32 0, %v255
    %v257 = vrot.slane %v252, %v256
    %259 = vmatprep.subr.mxu0 0.0
    %260 = vmatpush1.msra.mxu0 %v251
    %261 = vmatprep.subr.mxu0 0.0
    %262 = vmatpush1.msra.mxu0 %v250
    %263 = vmatprep.subr.mxu0 0.0
    %264 = vmatpush1.msra.mxu0 %v249
    %265 = vmatprep.subr.mxu0 0.0
    %266 = vmatpush1.msra.mxu0 %v248
    %267 = vmatprep.subr.mxu0 0.0
    %268 = vmatpush1.msra.mxu0 %v247
    %269 = vmatprep.subr.mxu0 0.0
    %270 = vmatpush1.msra.mxu0 %v246
    %271 = vmatprep.subr.mxu0 0.0
    %272 = vmatpush1.msra.mxu0 %v245
    %273 = vmatprep.subr.mxu0 0.0
    %274 = vmatpush1.msra.mxu0 %v244
    %275 = vmatprep.subr.mxu0 0.0
    %276 = vmatpush1.msra.mxu0 %v243
    %277 = vmatprep.subr.mxu0 0.0
    %278 = vmatpush1.msra.mxu0 %v242
    %279 = vmatprep.subr.mxu0 0.0
    %280 = vmatpush1.msra.mxu0 %v241
    %281 = vmatprep.subr.mxu0 0.0
    %282 = vmatpush1.msra.mxu0 %v240
    %283 = vmatprep.subr.mxu0 0.0
    %284 = vmatpush1.msra.mxu0 %v239
    %285 = vmatprep.subr.mxu0 0.0
    %286 = vmatpush1.msra.mxu0 %v238
    %287 = vmatprep.subr.mxu0 0.0
    %288 = vmatpush1.msra.mxu0 %v237
    %289 = vmatprep.subr.mxu0 0.0
    %290 = vmatpush1.msra.mxu0 %v236
    %291 = vmatprep.subr.mxu0 0.0
    %292 = vmatpush2.msra.mxu0 0.0
    %293 = vmatprep.subr.mxu0 0.0
    %294 = vmatpush2.msra.mxu0 0.0
    %295 = vmatprep.subr.mxu0 0.0
    %296 = vmatpush2.msra.mxu0 0.0
    %297 = vmatprep.subr.mxu0 0.0
    %298 = vmatpush2.msra.mxu0 0.0
    %299 = vmatprep.subr.mxu0 0.0
    %300 = vmatpush2.msra.mxu0 0.0
    %301 = vmatprep.subr.mxu0 0.0
    %302 = vmatpush2.msra.mxu0 0.0
    %303 = vmatprep.subr.mxu0 0.0
    %304 = vmatpush2.msra.mxu0 0.0
    %305 = vmatprep.subr.mxu0 0.0
    %306 = vmatpush2.msra.mxu0 0.0
    %307 = vmatprep.subr.mxu0 0.0
    %308 = vmatpush2.msra.mxu0 0.0
    %309 = vmatprep.subr.mxu0 0.0
    %310 = vmatpush2.msra.mxu0 0.0
    %311 = vmatprep.subr.mxu0 0.0
    %312 = vmatpush2.msra.mxu0 0.0
    %313 = vmatprep.subr.mxu0 0.0
    %314 = vmatpush2.msra.mxu0 0.0
    %315 = vmatprep.subr.mxu0 0.0
    %316 = vmatpush2.msra.mxu0 0.0
    %317 = vmatprep.subr.mxu0 0.0
    %318 = vmatpush2.msra.mxu0 0.0
    %319 = vmatprep.subr.mxu0 0.0
    %320 = vmatpush2.msra.mxu0 0.0
    %321 = vmatprep.subr.mxu0 0.0
    %322 = vmatpush2.msra.mxu0 0.0
    %323 = vmatprep.mubr.f32.mxu0 0.0
    %324 = vmatmul.mubr.f32.gmra.mxu0 %v235
    %v325 = vpop.f32.mrf.mxu0
    %v326 = vadd.f32 %v257, %v325
    %v327 = vpop.f32.mrf.mxu0
    %328 = vdwg.mxu0
    %vm329 = vcmask 33792
    %330 = vst.msk [vmem:[#allocation7] sm:$0x3] %vm329, %v326
    // Predicated region
    $region38: #{tpu_custom_call.1} parent=1 // pred_check
      _
    $region39: #{tpu_custom_call.1} parent=1 // pred_check_branch
      %332 = sbr.rel (0) target = $region41
    $region40: #{tpu_custom_call.1} parent=1 // pred_region
      %s334 = ssub.s32 32, 32
      %335 = vsyncadd [#allocation4], %s334
      %s337 = sshll.u32 [#allocation7], 4
      %s338 = int_to_ptr.vmem [resolvable:$true] %s337
      %340 = dma.vmem_to_hbm [thread:$0]  %s338, 32, %s7, [#allocation4]
    $region41: #{tpu_custom_call.1} parent=1 // pred_fallthru
      _
    // Predicated region
    $region42: #{tpu_custom_call.1} parent=1 // pred_check
      _
    $region43: #{tpu_custom_call.1} parent=1 // pred_check_branch
      %342 = sbr.rel (0) target = $region45
    $region44: #{tpu_custom_call.1} parent=1 // pred_region
      %343 = dma.done [#allocation4], 32
    $region45: #{tpu_custom_call.1} parent=1 // pred_fallthru
      _
    %344 = vsyncpa [#allocation3], 1
    %345 = vsyncpa [#allocation6], 1
    %346 = vsyncpa [#allocation4], 1

</llo_original>
